<compile_context>
chip_gen: v7x
topology: tpu7x:2x2x1
jax: 0.10.0
libtpu: 0.0.40
codegen_flags: <defaults>
</compile_context>

<pallas_src>
import functools

import jax
import jax.numpy as jnp
from jax.experimental import pallas as pl
from jax.experimental.pallas import tpu as pltpu

LANE = 128          # lane width
SUB = 8             # f32 sublane tile height
ROW_ALIGN = 16      # flat length padded to a multiple of ROW_ALIGN*LANE elements
TM_PREF = 2048      # preferred rows per grid step (1 MiB per f32 input per buffer)
CORE_SPLITS = 2     # leading 'parallel' grid axis (both TCs on v7x; harmless elsewhere)


def _cdiv(a, b):
    return -(-a // b)


def _homo_loss_kernel(img_ref, w1_ref, w2_ref, w3_ref,
                      o1_ref, o2_ref, o3_ref, out_ref,
                      *, l_num, tm, blocks_per_core, valid_rows, needs_mask):
    c = pl.program_id(0)          # core-split index ('parallel')
    j = pl.program_id(1)          # reduction step within this core ('arbitrary')

    # Zero this core's accumulator slab on its first reduction step.
    @pl.when(j == 0)
    def _():
        out_ref[...] = jnp.zeros_like(out_ref)

    if needs_mask:
        # Logical (un-clamped) row range owned by this step; rows past
        # `valid_rows` (ragged tail or duplicated clamped block) contribute 0.
        base_row = (c * blocks_per_core + j) * tm
        row_ids = base_row + jax.lax.broadcasted_iota(jnp.int32, (tm, LANE), 0)
        valid = row_ids < valid_rows

    img = img_ref[...].astype(jnp.float32)

    def accumulate(k, w_ref, o_ref):
        d = w_ref[...].astype(jnp.float32) - img * o_ref[...].astype(jnp.float32)
        d = d * d if l_num == 2 else jnp.abs(d)
        if needs_mask:
            d = jnp.where(valid, d, 0.0)   # select, not multiply -> NaN-safe
        # Sublane-aligned partial reduction: (tm,128)->(tm//8,8,128)->(8,128).
        # Pure whole-vreg VPU adds; the expensive cross-lane reduction happens
        # exactly once, in plain JAX, on a tiny array.
        out_ref[0, k, :, :] += jnp.sum(d.reshape(tm // SUB, SUB, LANE), axis=0)

    accumulate(0, w1_ref, o1_ref)
    accumulate(1, w2_ref, o2_ref)
    accumulate(2, w3_ref, o3_ref)


def homo_total_loss(img1, w2_h1, w2_h2, w2_h3, ow_h1, ow_h2, ow_h3,
                    *, l_num=1, tm_pref=TM_PREF, core_splits=CORE_SPLITS):
    """JAX/Pallas equivalent of Homo_Total_Loss(l_num).forward(...)."""
    total = img1.size                 # true element count (mean denominator)
    chunk = ROW_ALIGN * LANE
    pad = (-total) % chunk            # <= 2047 elements; zeros add 0 to the sums

    def prep(x):
        xf = x.reshape(-1)            # keep original dtype; cast happens in-kernel
        if pad:
            xf = jnp.pad(xf, (0, pad))
        return xf.reshape(-1, LANE)

    slabs = [prep(t) for t in (img1, w2_h1, w2_h2, w2_h3, ow_h1, ow_h2, ow_h3)]
    rows = slabs[0].shape[0]          # multiple of ROW_ALIGN

    tm_pref = max(ROW_ALIGN, _cdiv(int(tm_pref), ROW_ALIGN) * ROW_ALIGN)
    tm = min(tm_pref, rows)           # multiple of 16 (hence of 8), <= rows
    nblocks = _cdiv(rows, tm)
    splits = min(int(core_splits), nblocks)
    bpc = _cdiv(nblocks, splits)      # blocks per core
    needs_mask = splits * bpc * tm > rows

    def in_map(c, j):
        # Clamp so the DMA block anchor never walks past the last block; any
        # duplicated block is fully masked inside the kernel (logical rows >= rows).
        return (jnp.minimum(c * bpc + j, nblocks - 1), 0)

    in_spec = pl.BlockSpec((tm, LANE), in_map)

    sums = pl.pallas_call(
        functools.partial(_homo_loss_kernel, l_num=l_num, tm=tm,
                          blocks_per_core=bpc, valid_rows=rows,
                          needs_mask=needs_mask),
        out_shape=jax.ShapeDtypeStruct((splits, 3, SUB, LANE), jnp.float32),
        grid_spec=pltpu.PrefetchScalarGridSpec(
            num_scalar_prefetch=0,
            grid=(splits, bpc),
            in_specs=[in_spec] * 7,
            out_specs=pl.BlockSpec((1, 3, SUB, LANE), lambda c, j: (c, 0, 0, 0)),
        ),
        compiler_params=pltpu.CompilerParams(
            dimension_semantics=("parallel", "arbitrary"),
            vmem_limit_bytes=48 << 20),
    )(*slabs)

    # Final sublane/lane reduction + mean + weighted sum (cheap glue, plain JAX).
    per_loss = jnp.sum(sums, axis=(0, 2, 3)) / jnp.float32(total)
    return 1.0 * per_loss[0] + 4.0 * per_loss[1] + 16.0 * per_loss[2]


def _reference(img1, w2_h1, w2_h2, w2_h3, ow_h1, ow_h2, ow_h3, l_num=1):
    def red(a, b):
        d = a - b
        return jnp.mean(d * d) if l_num == 2 else jnp.mean(jnp.abs(d))
    l1 = red(w2_h1, img1 * ow_h1)
    l2 = red(w2_h2, img1 * ow_h2)
    l3 = red(w2_h3, img1 * ow_h3)
    return 1.0 * l1 + 4.0 * l2 + 16.0 * l3


if __name__ == "__main__":
    master = jax.random.PRNGKey(0)

    def make_inputs(shape, key):
        keys = jax.random.split(key, 7)
        img1  = jax.random.normal(keys[0], shape, dtype=jnp.float32)
        w2_h1 = jax.random.normal(keys[1], shape, dtype=jnp.float32)
        w2_h2 = jax.random.normal(keys[2], shape, dtype=jnp.float32)
        w2_h3 = jax.random.normal(keys[3], shape, dtype=jnp.float32)
        ow_h1 = jax.random.uniform(keys[4], shape, dtype=jnp.float32)
        ow_h2 = jax.random.uniform(keys[5], shape, dtype=jnp.float32)
        ow_h3 = jax.random.uniform(keys[6], shape, dtype=jnp.float32)
        return img1, w2_h1, w2_h2, w2_h3, ow_h1, ow_h2, ow_h3

    cases = [
        # (shape, l_num, tm_pref)
        ((2, 4, 16, 16), 1, TM_PREF),   # main NCHW case, L1
        ((2, 4, 16, 16), 2, TM_PREF),   # main NCHW case, MSE
        ((2, 3, 15, 17), 2, TM_PREF),   # total not a multiple of 128 -> tiny pad path
        ((2, 4, 32, 24), 1, 32),        # ragged last block + 2-way core split + row mask
        ((2, 4, 32, 24), 2, 16),        # odd block count -> clamped duplicate block, masked
    ]
    keys = jax.random.split(master, len(cases))
    for (shape, l_num, tm_pref), k in zip(cases, keys):
        args = make_inputs(shape, k)
        out = homo_total_loss(*args, l_num=l_num, tm_pref=tm_pref)
        out = jax.block_until_ready(out)
        ref = _reference(*args, l_num=l_num)
        assert jnp.allclose(out, ref, rtol=1e-5, atol=1e-6), (shape, l_num, out, ref)

    print("KERNEL_OK")
</pallas_src>

<mosaic_0001>
module attributes {stable_mosaic.version = 11 : i64} {
  func.func @_homo_loss_kernel(%arg0: i32, %arg1: i32, %arg2: memref<16x128xf32, #tpu.memory_space<vmem>>, %arg3: memref<16x128xf32, #tpu.memory_space<vmem>>, %arg4: memref<16x128xf32, #tpu.memory_space<vmem>>, %arg5: memref<16x128xf32, #tpu.memory_space<vmem>>, %arg6: memref<16x128xf32, #tpu.memory_space<vmem>>, %arg7: memref<16x128xf32, #tpu.memory_space<vmem>>, %arg8: memref<16x128xf32, #tpu.memory_space<vmem>>, %arg9: memref<1x3x8x128xf32, #tpu.memory_space<vmem>>) attributes {dimension_semantics = [#tpu.dimension_semantics<parallel>, #tpu.dimension_semantics<arbitrary>], iteration_bounds = array<i64: 1, 1>, scalar_prefetch = 0 : i64, scratch_operands = 0 : i64, tpu.core_type = #tpu.core_type<tc>, window_params = [{transform_indices = @transform_0, window_bounds = array<i64: 16, 128>}, {transform_indices = @transform_1, window_bounds = array<i64: 16, 128>}, {transform_indices = @transform_2, window_bounds = array<i64: 16, 128>}, {transform_indices = @transform_3, window_bounds = array<i64: 16, 128>}, {transform_indices = @transform_4, window_bounds = array<i64: 16, 128>}, {transform_indices = @transform_5, window_bounds = array<i64: 16, 128>}, {transform_indices = @transform_6, window_bounds = array<i64: 16, 128>}, {transform_indices = @transform_7, window_bounds = array<i64: 1, 3, 8, 128>}]} {
    %c0_i32 = arith.constant 0 : i32
    %0 = arith.cmpi eq, %arg1, %c0_i32 : i32
    %1 = arith.extui %0 : i1 to i32
    %c0_i32_0 = arith.constant 0 : i32
    %2 = arith.cmpi ne, %1, %c0_i32_0 : i32
    scf.if %2 {
      %cst_38 = arith.constant 0.000000e+00 : f32
      %43 = vector.broadcast %cst_38 : f32 to vector<1x3x8x128xf32>
      %c0_39 = arith.constant 0 : index
      %c0_40 = arith.constant 0 : index
      %c0_41 = arith.constant 0 : index
      %c0_42 = arith.constant 0 : index
      %44 = vector.load %arg9[%c0_39, %c0_40, %c0_41, %c0_42] : memref<1x3x8x128xf32, #tpu.memory_space<vmem>>, vector<1x3x8x128xf32>
      tpu.vector_store %arg9[%c0_39, %c0_40, %c0_41, %c0_42], %43 {strides = array<i32>} : memref<1x3x8x128xf32, #tpu.memory_space<vmem>>, vector<1x3x8x128xf32>,
    } else {
    }
    %c0 = arith.constant 0 : index
    %c0_1 = arith.constant 0 : index
    %3 = vector.load %arg2[%c0, %c0_1] : memref<16x128xf32, #tpu.memory_space<vmem>>, vector<16x128xf32>
    %c0_2 = arith.constant 0 : index
    %c0_3 = arith.constant 0 : index
    %4 = vector.load %arg3[%c0_2, %c0_3] : memref<16x128xf32, #tpu.memory_space<vmem>>, vector<16x128xf32>
    %c0_4 = arith.constant 0 : index
    %c0_5 = arith.constant 0 : index
    %5 = vector.load %arg6[%c0_4, %c0_5] : memref<16x128xf32, #tpu.memory_space<vmem>>, vector<16x128xf32>
    %6 = arith.mulf %3, %5 : vector<16x128xf32>
    %7 = arith.subf %4, %6 : vector<16x128xf32>
    %8 = math.absf %7 : vector<16x128xf32>
    %c0_6 = arith.constant 0 : index
    %c0_7 = arith.constant 0 : index
    %c0_8 = arith.constant 0 : index
    %c0_9 = arith.constant 0 : index
    %9 = vector.load %arg9[%c0_6, %c0_7, %c0_8, %c0_9] : memref<1x3x8x128xf32, #tpu.memory_space<vmem>>, vector<1x1x8x128xf32>
    %10 = vector.shape_cast %9 : vector<1x1x8x128xf32> to vector<8x128xf32>
    %11 = vector.shape_cast %8 : vector<16x128xf32> to vector<2x8x128xf32>
    %cst = arith.constant dense<0.000000e+00> : vector<8x128xf32>
    %12 = vector.multi_reduction <add>, %11, %cst [0] : vector<2x8x128xf32> to vector<8x128xf32>
    %13 = arith.addf %10, %12 : vector<8x128xf32>
    %c0_10 = arith.constant 0 : index
    %c0_11 = arith.constant 0 : index
    %c0_12 = arith.constant 0 : index
    %c0_13 = arith.constant 0 : index
    %14 = vector.load %arg9[%c0_10, %c0_11, %c0_12, %c0_13] : memref<1x3x8x128xf32, #tpu.memory_space<vmem>>, vector<1x1x8x128xf32>
    %15 = vector.shape_cast %14 : vector<1x1x8x128xf32> to vector<8x128xf32>
    %16 = vector.shape_cast %13 : vector<8x128xf32> to vector<1x1x8x128xf32>
    tpu.vector_store %arg9[%c0_10, %c0_11, %c0_12, %c0_13], %16 {strides = array<i32>} : memref<1x3x8x128xf32, #tpu.memory_space<vmem>>, vector<1x1x8x128xf32>,
    %c0_14 = arith.constant 0 : index
    %c0_15 = arith.constant 0 : index
    %17 = vector.load %arg4[%c0_14, %c0_15] : memref<16x128xf32, #tpu.memory_space<vmem>>, vector<16x128xf32>
    %c0_16 = arith.constant 0 : index
    %c0_17 = arith.constant 0 : index
    %18 = vector.load %arg7[%c0_16, %c0_17] : memref<16x128xf32, #tpu.memory_space<vmem>>, vector<16x128xf32>
    %19 = arith.mulf %3, %18 : vector<16x128xf32>
    %20 = arith.subf %17, %19 : vector<16x128xf32>
    %21 = math.absf %20 : vector<16x128xf32>
    %c0_18 = arith.constant 0 : index
    %c1 = arith.constant 1 : index
    %c0_19 = arith.constant 0 : index
    %c0_20 = arith.constant 0 : index
    %22 = vector.load %arg9[%c0_18, %c1, %c0_19, %c0_20] : memref<1x3x8x128xf32, #tpu.memory_space<vmem>>, vector<1x1x8x128xf32>
    %23 = vector.shape_cast %22 : vector<1x1x8x128xf32> to vector<8x128xf32>
    %24 = vector.shape_cast %21 : vector<16x128xf32> to vector<2x8x128xf32>
    %cst_21 = arith.constant dense<0.000000e+00> : vector<8x128xf32>
    %25 = vector.multi_reduction <add>, %24, %cst_21 [0] : vector<2x8x128xf32> to vector<8x128xf32>
    %26 = arith.addf %23, %25 : vector<8x128xf32>
    %c0_22 = arith.constant 0 : index
    %c1_23 = arith.constant 1 : index
    %c0_24 = arith.constant 0 : index
    %c0_25 = arith.constant 0 : index
    %27 = vector.load %arg9[%c0_22, %c1_23, %c0_24, %c0_25] : memref<1x3x8x128xf32, #tpu.memory_space<vmem>>, vector<1x1x8x128xf32>
    %28 = vector.shape_cast %27 : vector<1x1x8x128xf32> to vector<8x128xf32>
    %29 = vector.shape_cast %26 : vector<8x128xf32> to vector<1x1x8x128xf32>
    tpu.vector_store %arg9[%c0_22, %c1_23, %c0_24, %c0_25], %29 {strides = array<i32>} : memref<1x3x8x128xf32, #tpu.memory_space<vmem>>, vector<1x1x8x128xf32>,
    %c0_26 = arith.constant 0 : index
    %c0_27 = arith.constant 0 : index
    %30 = vector.load %arg5[%c0_26, %c0_27] : memref<16x128xf32, #tpu.memory_space<vmem>>, vector<16x128xf32>
    %c0_28 = arith.constant 0 : index
    %c0_29 = arith.constant 0 : index
    %31 = vector.load %arg8[%c0_28, %c0_29] : memref<16x128xf32, #tpu.memory_space<vmem>>, vector<16x128xf32>
    %32 = arith.mulf %3, %31 : vector<16x128xf32>
    %33 = arith.subf %30, %32 : vector<16x128xf32>
    %34 = math.absf %33 : vector<16x128xf32>
    %c0_30 = arith.constant 0 : index
    %c2 = arith.constant 2 : index
    %c0_31 = arith.constant 0 : index
    %c0_32 = arith.constant 0 : index
    %35 = vector.load %arg9[%c0_30, %c2, %c0_31, %c0_32] : memref<1x3x8x128xf32, #tpu.memory_space<vmem>>, vector<1x1x8x128xf32>
    %36 = vector.shape_cast %35 : vector<1x1x8x128xf32> to vector<8x128xf32>
    %37 = vector.shape_cast %34 : vector<16x128xf32> to vector<2x8x128xf32>
    %cst_33 = arith.constant dense<0.000000e+00> : vector<8x128xf32>
    %38 = vector.multi_reduction <add>, %37, %cst_33 [0] : vector<2x8x128xf32> to vector<8x128xf32>
    %39 = arith.addf %36, %38 : vector<8x128xf32>
    %c0_34 = arith.constant 0 : index
    %c2_35 = arith.constant 2 : index
    %c0_36 = arith.constant 0 : index
    %c0_37 = arith.constant 0 : index
    %40 = vector.load %arg9[%c0_34, %c2_35, %c0_36, %c0_37] : memref<1x3x8x128xf32, #tpu.memory_space<vmem>>, vector<1x1x8x128xf32>
    %41 = vector.shape_cast %40 : vector<1x1x8x128xf32> to vector<8x128xf32>
    %42 = vector.shape_cast %39 : vector<8x128xf32> to vector<1x1x8x128xf32>
    tpu.vector_store %arg9[%c0_34, %c2_35, %c0_36, %c0_37], %42 {strides = array<i32>} : memref<1x3x8x128xf32, #tpu.memory_space<vmem>>, vector<1x1x8x128xf32>,
    return
  }
  func.func @transform_0(%arg0: i32, %arg1: i32) -> (i32, i32) {
    %c1_i32 = arith.constant 1 : i32
    %0 = arith.muli %arg0, %c1_i32 : i32
    %1 = arith.addi %0, %arg1 : i32
    %c0_i32 = arith.constant 0 : i32
    %2 = arith.minsi %1, %c0_i32 : i32
    %c0_i32_0 = arith.constant 0 : i32
    %c0_i32_1 = arith.constant 0 : i32
    return %2, %c0_i32_0 : i32, i32
  }
  func.func @transform_1(%arg0: i32, %arg1: i32) -> (i32, i32) {
    %c1_i32 = arith.constant 1 : i32
    %0 = arith.muli %arg0, %c1_i32 : i32
    %1 = arith.addi %0, %arg1 : i32
    %c0_i32 = arith.constant 0 : i32
    %2 = arith.minsi %1, %c0_i32 : i32
    %c0_i32_0 = arith.constant 0 : i32
    %c0_i32_1 = arith.constant 0 : i32
    return %2, %c0_i32_0 : i32, i32
  }
  func.func @transform_2(%arg0: i32, %arg1: i32) -> (i32, i32) {
    %c1_i32 = arith.constant 1 : i32
    %0 = arith.muli %arg0, %c1_i32 : i32
    %1 = arith.addi %0, %arg1 : i32
    %c0_i32 = arith.constant 0 : i32
    %2 = arith.minsi %1, %c0_i32 : i32
    %c0_i32_0 = arith.constant 0 : i32
    %c0_i32_1 = arith.constant 0 : i32
    return %2, %c0_i32_0 : i32, i32
  }
  func.func @transform_3(%arg0: i32, %arg1: i32) -> (i32, i32) {
    %c1_i32 = arith.constant 1 : i32
    %0 = arith.muli %arg0, %c1_i32 : i32
    %1 = arith.addi %0, %arg1 : i32
    %c0_i32 = arith.constant 0 : i32
    %2 = arith.minsi %1, %c0_i32 : i32
    %c0_i32_0 = arith.constant 0 : i32
    %c0_i32_1 = arith.constant 0 : i32
    return %2, %c0_i32_0 : i32, i32
  }
  func.func @transform_4(%arg0: i32, %arg1: i32) -> (i32, i32) {
    %c1_i32 = arith.constant 1 : i32
    %0 = arith.muli %arg0, %c1_i32 : i32
    %1 = arith.addi %0, %arg1 : i32
    %c0_i32 = arith.constant 0 : i32
    %2 = arith.minsi %1, %c0_i32 : i32
    %c0_i32_0 = arith.constant 0 : i32
    %c0_i32_1 = arith.constant 0 : i32
    return %2, %c0_i32_0 : i32, i32
  }
  func.func @transform_5(%arg0: i32, %arg1: i32) -> (i32, i32) {
    %c1_i32 = arith.constant 1 : i32
    %0 = arith.muli %arg0, %c1_i32 : i32
    %1 = arith.addi %0, %arg1 : i32
    %c0_i32 = arith.constant 0 : i32
    %2 = arith.minsi %1, %c0_i32 : i32
    %c0_i32_0 = arith.constant 0 : i32
    %c0_i32_1 = arith.constant 0 : i32
    return %2, %c0_i32_0 : i32, i32
  }
  func.func @transform_6(%arg0: i32, %arg1: i32) -> (i32, i32) {
    %c1_i32 = arith.constant 1 : i32
    %0 = arith.muli %arg0, %c1_i32 : i32
    %1 = arith.addi %0, %arg1 : i32
    %c0_i32 = arith.constant 0 : i32
    %2 = arith.minsi %1, %c0_i32 : i32
    %c0_i32_0 = arith.constant 0 : i32
    %c0_i32_1 = arith.constant 0 : i32
    return %2, %c0_i32_0 : i32, i32
  }
  func.func @transform_7(%arg0: i32, %arg1: i32) -> (i32, i32, i32, i32) {
    %c0_i32 = arith.constant 0 : i32
    %c0_i32_0 = arith.constant 0 : i32
    %c0_i32_1 = arith.constant 0 : i32
    %c0_i32_2 = arith.constant 0 : i32
    return %arg0, %c0_i32, %c0_i32_0, %c0_i32_1 : i32, i32, i32, i32
  }
}

</mosaic_0001>

<llo_original>
// kernel: tpu_custom_call.1
$region0: #{tpu_custom_call.1}
  #allocation0 [shape = 'u32[]', space=smem, size = 0x4, offset = 0x4, fixed_abs, tag = 'smem constant byte address 0x4 - core index']
  #allocation1 [shape = 'u32[144,128]{1,0:T(1,128)}', space=vmem, size = 0x12000, scoped, tag = 'internal scratch']
  %s0 = inlined_call_operand.hbm [shape: f32[16,128], index: 0, kind: input, shape index: {}]
  %s1 = inlined_call_operand.hbm [shape: f32[16,128], index: 1, kind: input, shape index: {}]
  %s2 = inlined_call_operand.hbm [shape: f32[16,128], index: 2, kind: input, shape index: {}]
  %s3 = inlined_call_operand.hbm [shape: f32[16,128], index: 3, kind: input, shape index: {}]
  %s4 = inlined_call_operand.hbm [shape: f32[16,128], index: 4, kind: input, shape index: {}]
  %s5 = inlined_call_operand.vmem [shape: f32[16,128], index: 5, kind: input, shape index: {}]
  %s6 = inlined_call_operand.hbm [shape: f32[16,128], index: 6, kind: input, shape index: {}]
  %s7 = inlined_call_operand.hbm [shape: f32[1,3,8,128], index: 7, kind: output, shape index: {}]
  %s8 = sld [smem:[#allocation0]]
  $region66: #{tpu_custom_call.1} parent=0
    _
  %s10 = ssub.s32 1, %s8
  %s11 = scalar_select 0, %s10, %s8
  $region1: #{tpu_custom_call.1} parent=0
    #allocation2 [shape = 'u8[8192]{0}', space=vmem, size = 0x2000, scoped, tag = 'input window, operand 0, single buffered']
    #allocation3 [shape = 's32[1]{0}', space=sflag, size = 0x4, scoped, tag = 'scoped memory for tpu_custom_call.1']
    #allocation4 [shape = 's32[1]{0}', space=sflag, size = 0x4, scoped, tag = 'scoped memory for tpu_custom_call.1']
    #allocation5 [shape = 'u8[8192]{0}', space=vmem, size = 0x2000, scoped, tag = 'input window, operand 1, single buffered']
    #allocation6 [shape = 's32[1]{0}', space=sflag, size = 0x4, scoped, tag = 'scoped memory for tpu_custom_call.1']
    #allocation7 [shape = 'u8[8192]{0}', space=vmem, size = 0x2000, scoped, tag = 'input window, operand 2, single buffered']
    #allocation8 [shape = 'u8[8192]{0}', space=vmem, size = 0x2000, scoped, tag = 'input window, operand 3, single buffered']
    #allocation9 [shape = 's32[1]{0}', space=sflag, size = 0x4, scoped, tag = 'scoped memory for tpu_custom_call.1']
    #allocation10 [shape = 'u8[8192]{0}', space=vmem, size = 0x2000, scoped, tag = 'input window, operand 4, single buffered']
    #allocation11 [shape = 'u8[8192]{0}', space=vmem, size = 0x2000, scoped, tag = 'input window, operand 6, single buffered']
    #allocation12 [shape = 's32[1]{0}', space=sflag, size = 0x4, scoped, tag = 'scoped memory for tpu_custom_call.1']
    #allocation13 [shape = 'u8[12288]{0}', space=vmem, size = 0x3000, scoped, tag = 'output window, operand 0, single buffered']
    %12 = vsyncpa [#allocation3], 0
    %13 = vsyncpa [#allocation6], 0
    %14 = vsyncpa [#allocation9], 0
    %15 = vsyncpa [#allocation12], 0
    %16 = vsyncpa [#allocation4], 0
    // Predicated region
    $region2: #{tpu_custom_call.1} parent=1 // pred_check
      _
    $region3: #{tpu_custom_call.1} parent=1 // pred_check_branch
      %18 = sbr.rel (0) target = $region5
    $region4: #{tpu_custom_call.1} parent=1 // pred_region
      %s19 = sadd.s32 0, 0
      %p20 = scmp.lt.s32.totalorder %s19, 0
      %s21 = scalar_select %p20, %s19, 0
      %s22 = smul.u32 2, %s21
      %s24 = ssub.s32 256, 256
      %25 = vsyncadd [#allocation3], %s24
      %s26 = smul.addr %s22, 128
      %s27 = scalar_lea.hbm %s0, %s26
      %s28 = sshll.u32 [#allocation2], 4
      %s29 = int_to_ptr.vmem [resolvable:$true] %s28
      %34 = dma.hbm_to_vmem [thread:$0]  %s27, 256, %s29, [#allocation3], 128, 128, 8
    $region5: #{tpu_custom_call.1} parent=1 // pred_fallthru
      _
    // Predicated region
    $region6: #{tpu_custom_call.1} parent=1 // pred_check
      _
    $region7: #{tpu_custom_call.1} parent=1 // pred_check_branch
      %36 = sbr.rel (0) target = $region9
    $region8: #{tpu_custom_call.1} parent=1 // pred_region
      %s37 = sadd.s32 0, 0
      %p38 = scmp.lt.s32.totalorder %s37, 0
      %s39 = scalar_select %p38, %s37, 0
      %s40 = smul.u32 2, %s39
      %s42 = ssub.s32 256, 256
      %43 = vsyncadd [#allocation6], %s42
      %s44 = smul.addr %s40, 128
      %s45 = scalar_lea.hbm %s1, %s44
      %s46 = sshll.u32 [#allocation5], 4
      %s47 = int_to_ptr.vmem [resolvable:$true] %s46
      %52 = dma.hbm_to_vmem [thread:$0]  %s45, 256, %s47, [#allocation6], 128, 128, 8
    $region9: #{tpu_custom_call.1} parent=1 // pred_fallthru
      _
    // Predicated region
    $region10: #{tpu_custom_call.1} parent=1 // pred_check
      _
    $region11: #{tpu_custom_call.1} parent=1 // pred_check_branch
      %54 = sbr.rel (0) target = $region13
    $region12: #{tpu_custom_call.1} parent=1 // pred_region
      %s55 = sadd.s32 0, 0
      %p56 = scmp.lt.s32.totalorder %s55, 0
      %s57 = scalar_select %p56, %s55, 0
      %s58 = smul.u32 2, %s57
      %s60 = ssub.s32 256, 256
      %61 = vsyncadd [#allocation6], %s60
      %s62 = smul.addr %s58, 128
      %s63 = scalar_lea.hbm %s2, %s62
      %s64 = sshll.u32 [#allocation7], 4
      %s65 = int_to_ptr.vmem [resolvable:$true] %s64
      %70 = dma.hbm_to_vmem [thread:$0]  %s63, 256, %s65, [#allocation6], 128, 128, 8
    $region13: #{tpu_custom_call.1} parent=1 // pred_fallthru
      _
    // Predicated region
    $region14: #{tpu_custom_call.1} parent=1 // pred_check
      _
    $region15: #{tpu_custom_call.1} parent=1 // pred_check_branch
      %72 = sbr.rel (0) target = $region17
    $region16: #{tpu_custom_call.1} parent=1 // pred_region
      %s73 = sadd.s32 0, 0
      %p74 = scmp.lt.s32.totalorder %s73, 0
      %s75 = scalar_select %p74, %s73, 0
      %s76 = smul.u32 2, %s75
      %s78 = ssub.s32 256, 256
      %79 = vsyncadd [#allocation9], %s78
      %s80 = smul.addr %s76, 128
      %s81 = scalar_lea.hbm %s3, %s80
      %s82 = sshll.u32 [#allocation8], 4
      %s83 = int_to_ptr.vmem [resolvable:$true] %s82
      %88 = dma.hbm_to_vmem [thread:$0]  %s81, 256, %s83, [#allocation9], 128, 128, 8
    $region17: #{tpu_custom_call.1} parent=1 // pred_fallthru
      _
    // Predicated region
    $region18: #{tpu_custom_call.1} parent=1 // pred_check
      _
    $region19: #{tpu_custom_call.1} parent=1 // pred_check_branch
      %90 = sbr.rel (0) target = $region21
    $region20: #{tpu_custom_call.1} parent=1 // pred_region
      %s91 = sadd.s32 0, 0
      %p92 = scmp.lt.s32.totalorder %s91, 0
      %s93 = scalar_select %p92, %s91, 0
      %s94 = smul.u32 2, %s93
      %s96 = ssub.s32 256, 256
      %97 = vsyncadd [#allocation9], %s96
      %s98 = smul.addr %s94, 128
      %s99 = scalar_lea.hbm %s4, %s98
      %s100 = sshll.u32 [#allocation10], 4
      %s101 = int_to_ptr.vmem [resolvable:$true] %s100
      %106 = dma.hbm_to_vmem [thread:$0]  %s99, 256, %s101, [#allocation9], 128, 128, 8
    $region21: #{tpu_custom_call.1} parent=1 // pred_fallthru
      _
    // Predicated region
    $region22: #{tpu_custom_call.1} parent=1 // pred_check
      _
    $region23: #{tpu_custom_call.1} parent=1 // pred_check_branch
      %108 = sbr.rel (0) target = $region25
    $region24: #{tpu_custom_call.1} parent=1 // pred_region
      %s109 = sadd.s32 0, 0
      %p110 = scmp.lt.s32.totalorder %s109, 0
      %s111 = scalar_select %p110, %s109, 0
      %s112 = smul.u32 2, %s111
      %p113 = scmp.lt.s32.totalorder %s112, 1
      %s114 = scalar_select %p113, %s112, 1
      %s115 = smul.addr %s114, 8
      %s116 = scalar_lea.vmem %s5, %s115
      %s117 = sadd.s32 0, 0
      %p118 = scmp.lt.s32.totalorder %s117, 0
      %s119 = scalar_select %p118, %s117, 0
      %s120 = smul.u32 2, %s119
    $region25: #{tpu_custom_call.1} parent=1 // pred_fallthru
      _
    // Predicated region
    $region26: #{tpu_custom_call.1} parent=1 // pred_check
      _
    $region27: #{tpu_custom_call.1} parent=1 // pred_check_branch
      %122 = sbr.rel (0) target = $region29
    $region28: #{tpu_custom_call.1} parent=1 // pred_region
      %s123 = sadd.s32 0, 0
      %p124 = scmp.lt.s32.totalorder %s123, 0
      %s125 = scalar_select %p124, %s123, 0
      %s126 = smul.u32 2, %s125
      %s128 = ssub.s32 256, 256
      %129 = vsyncadd [#allocation12], %s128
      %s130 = smul.addr %s126, 128
      %s131 = scalar_lea.hbm %s6, %s130
      %s132 = sshll.u32 [#allocation11], 4
      %s133 = int_to_ptr.vmem [resolvable:$true] %s132
      %138 = dma.hbm_to_vmem [thread:$0]  %s131, 256, %s133, [#allocation12], 128, 128, 8
    $region29: #{tpu_custom_call.1} parent=1 // pred_fallthru
      _
    // Predicated region
    $region30: #{tpu_custom_call.1} parent=1 // pred_check
      _
    $region31: #{tpu_custom_call.1} parent=1 // pred_check_branch
      %140 = sbr.rel (0) target = $region33
    $region32: #{tpu_custom_call.1} parent=1 // pred_region
      %141 = dma.done [#allocation3], 256
    $region33: #{tpu_custom_call.1} parent=1 // pred_fallthru
      _
    // Predicated region
    $region34: #{tpu_custom_call.1} parent=1 // pred_check
      _
    $region35: #{tpu_custom_call.1} parent=1 // pred_check_branch
      %143 = sbr.rel (0) target = $region37
    $region36: #{tpu_custom_call.1} parent=1 // pred_region
      %144 = dma.done [#allocation6], 256
    $region37: #{tpu_custom_call.1} parent=1 // pred_fallthru
      _
    // Predicated region
    $region38: #{tpu_custom_call.1} parent=1 // pred_check
      _
    $region39: #{tpu_custom_call.1} parent=1 // pred_check_branch
      %146 = sbr.rel (0) target = $region41
    $region40: #{tpu_custom_call.1} parent=1 // pred_region
      %147 = dma.done [#allocation6], 256
    $region41: #{tpu_custom_call.1} parent=1 // pred_fallthru
      _
    // Predicated region
    $region42: #{tpu_custom_call.1} parent=1 // pred_check
      _
    $region43: #{tpu_custom_call.1} parent=1 // pred_check_branch
      %149 = sbr.rel (0) target = $region45
    $region44: #{tpu_custom_call.1} parent=1 // pred_region
      %150 = dma.done [#allocation9], 256
    $region45: #{tpu_custom_call.1} parent=1 // pred_fallthru
      _
    // Predicated region
    $region46: #{tpu_custom_call.1} parent=1 // pred_check
      _
    $region47: #{tpu_custom_call.1} parent=1 // pred_check_branch
      %152 = sbr.rel (0) target = $region49
    $region48: #{tpu_custom_call.1} parent=1 // pred_region
      %153 = dma.done [#allocation9], 256
    $region49: #{tpu_custom_call.1} parent=1 // pred_fallthru
      _
    // Predicated region
    $region50: #{tpu_custom_call.1} parent=1 // pred_check
      _
    $region51: #{tpu_custom_call.1} parent=1 // pred_check_branch
      %155 = sbr.rel (0) target = $region53
    $region52: #{tpu_custom_call.1} parent=1 // pred_region
      %156 = dma.done [#allocation12], 256
    $region53: #{tpu_custom_call.1} parent=1 // pred_fallthru
      _
    %s157 = sadd.s32 0, 0
    %p158 = scmp.lt.s32.totalorder %s157, 0
    %s159 = scalar_select %p158, %s157, 0
    %s160 = smul.u32 2, %s159
    %p161 = scmp.lt.s32.totalorder %s160, 1
    %s162 = scalar_select %p161, %s160, 1
    %s163 = smul.addr %s162, 8
    %s164 = scalar_lea.vmem %s5, %s163
    %s165 = sadd.s32 0, 0
    %p166 = scmp.lt.s32.totalorder %s165, 0
    %s167 = scalar_select %p166, %s165, 0
    %s168 = smul.u32 2, %s167
    %s169 = sadd.s32 0, 0
    %p170 = scmp.lt.s32.totalorder %s169, 0
    %s171 = scalar_select %p170, %s169, 0
    %s172 = smul.u32 2, %s171
    %s173 = sadd.s32 0, 0
    %p174 = scmp.lt.s32.totalorder %s173, 0
    %s175 = scalar_select %p174, %s173, 0
    %s176 = smul.u32 2, %s175
    %s177 = sadd.s32 0, 0
    %p178 = scmp.lt.s32.totalorder %s177, 0
    %s179 = scalar_select %p178, %s177, 0
    %s180 = smul.u32 2, %s179
    %s181 = sadd.s32 0, 0
    %p182 = scmp.lt.s32.totalorder %s181, 0
    %s183 = scalar_select %p182, %s181, 0
    %s184 = smul.u32 2, %s183
    %s185 = sadd.s32 0, 0
    %p186 = scmp.lt.s32.totalorder %s185, 0
    %s187 = scalar_select %p186, %s185, 0
    %s188 = smul.u32 2, %s187
    %p189 = scmp.lt.s32.totalorder %s188, 1
    %s190 = scalar_select %p189, %s188, 1
    %s191 = smul.addr %s190, 8
    %s192 = scalar_lea.vmem %s5, %s191
    %s193 = sadd.s32 0, 0
    %p194 = scmp.lt.s32.totalorder %s193, 0
    %s195 = scalar_select %p194, %s193, 0
    %s196 = smul.u32 2, %s195
    %s197 = sadd.s32 0, 0
    %p198 = scmp.lt.s32.totalorder %s197, 0
    %s199 = scalar_select %p198, %s197, 0
    %s200 = smul.u32 2, %s199
    %p201 = scmp.eq.s32.totalorder 0, 0
    // Predicated region
    $region54: #{tpu_custom_call.1} parent=1 // pred_check
      %p202 = pneg %p201
    $region55: #{tpu_custom_call.1} parent=1 // pred_check_branch
      %204 = sbr.rel (%p202) target = $region57
    $region56: #{tpu_custom_call.1} parent=1 // pred_region
      %205 = vst [vmem:[#allocation13] sm:$0xff] 0.0
      %206 = vst [vmem:[#allocation13 + $0x8] sm:$0xff] 0.0
      %207 = vst [vmem:[#allocation13 + $0x10] sm:$0xff] 0.0
    $region57: #{tpu_custom_call.1} parent=1 // pred_fallthru
      _
    %v208 = vld [vmem:[#allocation2] sm:$0xff]
    %v209 = vld [vmem:[#allocation2 + $0x8] sm:$0xff]
    %v210 = vld [vmem:[#allocation5] sm:$0xff]
    %v211 = vld [vmem:[#allocation5 + $0x8] sm:$0xff]
    %v212 = vld [vmem:[#allocation10] sm:$0xff]
    %v213 = vld [vmem:[#allocation10 + $0x8] sm:$0xff]
    %v214 = vmul.f32 %v208, %v212
    %v215 = vmul.f32 %v209, %v213
    %v216 = vsub.f32 %v210, %v214
    %v217 = vsub.f32 %v211, %v215
    %v218 = vand.u32 2147483647, %v216
    %v219 = vand.u32 2147483647, %v217
    %v220 = vld [vmem:[#allocation13] sm:$0xff]
    %v221 = vadd.f32 %v218, %v219
    %v222 = vadd.f32 %v220, %v221
    %223 = vst [vmem:[#allocation13] sm:$0xff] %v222
    %v224 = vld [vmem:[#allocation7] sm:$0xff]
    %v225 = vld [vmem:[#allocation7 + $0x8] sm:$0xff]
    %v226 = vld [vmem:[%s192] sm:$0xff]
    %v227 = vld [vmem:[%s192 + $0x8] sm:$0xff]
    %v228 = vmul.f32 %v208, %v226
    %v229 = vmul.f32 %v209, %v227
    %v230 = vsub.f32 %v224, %v228
    %v231 = vsub.f32 %v225, %v229
    %v232 = vand.u32 2147483647, %v230
    %v233 = vand.u32 2147483647, %v231
    %s234 = scalar_lea.vmem [#allocation13], 8
    %v235 = vld [vmem:[%s234] sm:$0xff]
    %v236 = vadd.f32 %v232, %v233
    %v237 = vadd.f32 %v235, %v236
    %238 = vst [vmem:[%s234] sm:$0xff] %v237
    %v239 = vld [vmem:[#allocation8] sm:$0xff]
    %v240 = vld [vmem:[#allocation8 + $0x8] sm:$0xff]
    %v241 = vld [vmem:[#allocation11] sm:$0xff]
    %v242 = vld [vmem:[#allocation11 + $0x8] sm:$0xff]
    %v243 = vmul.f32 %v208, %v241
    %v244 = vmul.f32 %v209, %v242
    %v245 = vsub.f32 %v239, %v243
    %v246 = vsub.f32 %v240, %v244
    %v247 = vand.u32 2147483647, %v245
    %v248 = vand.u32 2147483647, %v246
    %s249 = scalar_lea.vmem [#allocation13], 16
    %v250 = vld [vmem:[%s249] sm:$0xff]
    %v251 = vadd.f32 %v247, %v248
    %v252 = vadd.f32 %v250, %v251
    %253 = vst [vmem:[%s249] sm:$0xff] %v252
    // Predicated region
    $region58: #{tpu_custom_call.1} parent=1 // pred_check
      _
    $region59: #{tpu_custom_call.1} parent=1 // pred_check_branch
      %255 = sbr.rel (0) target = $region61
    $region60: #{tpu_custom_call.1} parent=1 // pred_region
      %s257 = ssub.s32 384, 384
      %258 = vsyncadd [#allocation4], %s257
      %s259 = sshll.u32 [#allocation13], 4
      %s260 = int_to_ptr.vmem [resolvable:$true] %s259
      %265 = dma.vmem_to_hbm [thread:$0]  %s260, 384, %s7, [#allocation4], 128, 128, 8
    $region61: #{tpu_custom_call.1} parent=1 // pred_fallthru
      _
    // Predicated region
    $region62: #{tpu_custom_call.1} parent=1 // pred_check
      _
    $region63: #{tpu_custom_call.1} parent=1 // pred_check_branch
      %267 = sbr.rel (0) target = $region65
    $region64: #{tpu_custom_call.1} parent=1 // pred_region
      %268 = dma.done [#allocation4], 384
    $region65: #{tpu_custom_call.1} parent=1 // pred_fallthru
      _
    %269 = vsyncpa [#allocation3], 1
    %270 = vsyncpa [#allocation6], 1
    %271 = vsyncpa [#allocation9], 1
    %272 = vsyncpa [#allocation12], 1
    %273 = vsyncpa [#allocation4], 1

</llo_original>
